<compile_context>
chip_gen: v5e
topology: v5e:2x2
jax: 0.10.0
libtpu: 0.0.40
codegen_flags: <defaults>
</compile_context>

<pallas_src>
import functools

import jax
import jax.numpy as jnp
from jax import lax
from jax.experimental import pallas as pl
from jax.experimental.pallas import tpu as pltpu

LANES = 128        # lane width of a vreg (last dim)
SUBLANES = 8       # sublane width of a vreg (second-to-last dim)
TB_CAP = 2048      # max rows per batch tile (multiple of 8)
MIN_SPLIT_ROWS = 256    # below this, don't bother splitting into >=2 tiles
PALLAS_MIN_BATCH = 64   # below this, skip Pallas and let XLA fuse


def _round_up(x, m):
    return (x + m - 1) // m * m


def _hash_keep_mask(shape, seed_u32, tile_u32, drop_p):
    """Counter-based keep mask with P(keep) = 1 - drop_p.

    Cheap on the VPU: the per-element counter is (row << 16) | col (valid while
    rows <= 65536 and cols <= 65536 -- here rows <= 2048, cols = 128), mixed
    with a scalar seed/tile offset, then a lowbias32 finalizer.  Only 2 vector
    32-bit multiplies total (vs ~4-5 in the previous murmur3-style chain).
    Pure jnp/lax bit ops, so it lowers identically in Mosaic, interpret mode,
    and the plain-XLA small-batch fallback.
    """
    r = lax.broadcasted_iota(jnp.uint32, shape, 0)
    c = lax.broadcasted_iota(jnp.uint32, shape, 1)
    offset = seed_u32 * jnp.uint32(0x9E3779B1) + tile_u32 * jnp.uint32(0x85EBCA77)
    h = ((r << jnp.uint32(16)) | c) + offset
    # lowbias32 finalizer (2 multiplies) -- ample mixing quality for dropout.
    h = h ^ (h >> jnp.uint32(16))
    h = h * jnp.uint32(0x7FEB352D)
    h = h ^ (h >> jnp.uint32(15))
    h = h * jnp.uint32(0x846CA68B)
    h = h ^ (h >> jnp.uint32(16))
    # Integer-threshold keep test: P(keep) = 1 - drop_p (to 2^-32 quantization).
    thresh = jnp.uint32(min(int(round(drop_p * (1 << 32))), (1 << 32) - 1))
    return h >= thresh


def _apply_relu_dropout(y, seed_u32, tile_u32, *, drop_p, training):
    """ReLU + (optional, inverted) dropout epilogue in f32."""
    y = jnp.maximum(y, 0.0)
    if training and drop_p > 0.0:
        if drop_p >= 1.0:
            y = jnp.zeros_like(y)           # p == 1: drop everything, no 1/(1-p)
        else:
            keep = _hash_keep_mask(y.shape, seed_u32, tile_u32, drop_p)
            y = jnp.where(keep, y * jnp.float32(1.0 / (1.0 - drop_p)), 0.0)
    return y


def _fc_kernel(seed_ref, x_ref, w_ref, *rest, drop_p, training, use_bias):
    if use_bias:
        b_ref, o_ref = rest
    else:
        (o_ref,) = rest

    # MXU: bf16 [TB, F_in] @ bf16 [F_in, C_pad] -> f32 [TB, C_pad] (lane-dense N).
    y = jnp.dot(x_ref[...], w_ref[...], preferred_element_type=jnp.float32)
    if use_bias:
        y = y + b_ref[...]                  # [1, C_pad] broadcasts over batch tile

    seed = seed_ref[0]                      # uint32 scalar from SMEM
    tile = pl.program_id(0).astype(jnp.uint32)
    y = _apply_relu_dropout(y, seed, tile, drop_p=drop_p, training=training)

    o_ref[...] = y.astype(o_ref.dtype)


def prepare_fc_params(w, b, compute_dtype=jnp.bfloat16):
    """One-time parameter prep (hoisted out of the forward hot path).

    w: [C, F_in] (PyTorch layout), b: [C] or None.
    Returns (w_t_padded bf16 [F_in, C_pad], b_padded f32 [1, C_pad] or None, C).
    """
    C, F_in = w.shape
    C_pad = _round_up(max(C, 1), LANES)
    w_t = jnp.zeros((F_in, C_pad), compute_dtype).at[:, :C].set(w.T.astype(compute_dtype))
    b_pad = None
    if b is not None:
        b_pad = jnp.zeros((1, C_pad), jnp.float32).at[:, :C].set(
            b.reshape(1, C).astype(jnp.float32))
    return w_t, b_pad, C


def _choose_batch_tile(B):
    """Pick (TB, B_pad): fat tiles, and an even tile count for v7x's 2 TCs."""
    B8 = _round_up(max(B, 1), SUBLANES)
    if B8 < MIN_SPLIT_ROWS:
        return B8, B8                        # single small tile
    n_pairs = max(1, pl.cdiv(B8, 2 * TB_CAP))
    TB = _round_up(pl.cdiv(B8, 2 * n_pairs), SUBLANES)
    return TB, _round_up(B8, TB)


@functools.partial(
    jax.jit, static_argnames=("num_classes", "drop_p", "training", "padded_output"))
def fc_forward(x, w_pad, b_pad, seed, *, num_classes, drop_p, training,
               padded_output=False):
    """x: [B, F_in] f32; w_pad: bf16 [F_in, C_pad]; b_pad: f32 [1, C_pad] or None;
    seed: uint32[1].  Returns f32 [B, num_classes] (or padded slab if requested)."""
    B, F_in = x.shape
    C_pad = w_pad.shape[1]
    use_bias = b_pad is not None
    drop_p = float(drop_p)
    training = bool(training)

    # ---- Tiny-batch fast path: a single-tile Pallas launch is pure overhead;
    #      let XLA fuse Linear + ReLU + dropout instead.
    if B < PALLAS_MIN_BATCH:
        y = jnp.dot(x.astype(w_pad.dtype), w_pad, preferred_element_type=jnp.float32)
        if use_bias:
            y = y + b_pad
        y = _apply_relu_dropout(y, seed[0], jnp.uint32(0),
                                drop_p=drop_p, training=training)
        return y if padded_output else y[:, :num_classes]

    # ---- Pallas path (batch tiled over a 1-D grid).
    TB, B_pad = _choose_batch_tile(B)
    num_tiles = B_pad // TB

    x = x.astype(w_pad.dtype)                               # bf16 x halves DMA bytes
    if B_pad != B:
        x = jnp.zeros((B_pad, F_in), x.dtype).at[:B, :].set(x)

    kernel = functools.partial(
        _fc_kernel, drop_p=drop_p, training=training, use_bias=use_bias)

    in_specs = [
        pl.BlockSpec(memory_space=pltpu.MemorySpace.SMEM),  # seed (uint32 scalar)
        pl.BlockSpec((TB, F_in), lambda i: (i, 0)),         # x batch tile (bf16)
        pl.BlockSpec((F_in, C_pad), lambda i: (0, 0)),      # W^T, whole & VMEM-resident
    ]
    inputs = [seed, x, w_pad]
    if use_bias:
        in_specs.append(pl.BlockSpec((1, C_pad), lambda i: (0, 0)))
        inputs.append(b_pad)

    bytes_in = x.size * 2 + w_pad.size * 2 + (b_pad.size * 4 if use_bias else 0)
    cost = pl.CostEstimate(
        flops=2 * B_pad * F_in * C_pad,
        transcendentals=0,
        bytes_accessed=bytes_in + B_pad * C_pad * 4,
    )

    out = pl.pallas_call(
        kernel,
        out_shape=jax.ShapeDtypeStruct((B_pad, C_pad), jnp.float32),
        grid=(num_tiles,),
        in_specs=in_specs,
        out_specs=pl.BlockSpec((TB, C_pad), lambda i: (i, 0)),
        compiler_params=pltpu.CompilerParams(
            dimension_semantics=("parallel",)),   # shards batch tiles across TCs on v7x
        cost_estimate=cost,
    )(*inputs)

    if padded_output:
        # Downstream consumers can mask/slice lazily and skip an extra HBM pass.
        return out
    return out[:B, :num_classes]


if __name__ == "__main__":
    # Module config: FC(drop_out=0.5, num_classes=10, bias=True)
    DROP_OUT = 0.5
    NUM_CLASSES = 10
    BIAS = True
    F_IN = 20
    B = 512        # multi-tile Pallas path (2 tiles of 256 -> both v7x TensorCores)

    key = jax.random.PRNGKey(0)
    kx, kw, kb, kx2 = jax.random.split(key, 4)

    x = jax.random.normal(kx, (B, F_IN), dtype=jnp.float32)
    bound = 1.0 / (F_IN ** 0.5)
    w = jax.random.uniform(kw, (NUM_CLASSES, F_IN), jnp.float32, -bound, bound)
    b = jax.random.uniform(kb, (NUM_CLASSES,), jnp.float32, -bound, bound) if BIAS else None

    # One-time param prep (transpose + lane padding + bf16 cast) — out of hot path.
    w_pad, b_pad, C = prepare_fc_params(w, b)

    # Reference uses the same bf16 rounding of the inputs the MXU sees (f32 accumulate).
    xb = x.astype(jnp.bfloat16).astype(jnp.float32)
    wb = w.astype(jnp.bfloat16).astype(jnp.float32)
    ref = jnp.maximum(xb @ wb.T + (b if BIAS else 0.0), 0.0)

    seed0 = jnp.array([0], jnp.uint32)

    # Eval mode (dropout = identity).
    out_eval = fc_forward(x, w_pad, b_pad, seed0,
                          num_classes=C, drop_p=DROP_OUT, training=False)
    assert out_eval.shape == (B, NUM_CLASSES)
    assert jnp.allclose(out_eval, ref, atol=1e-4, rtol=1e-4)

    # Train mode: inverted dropout; every element is 0 or a kept, rescaled output.
    out_train = fc_forward(x, w_pad, b_pad, jnp.array([123], jnp.uint32),
                           num_classes=C, drop_p=DROP_OUT, training=True)
    scale = 1.0 / (1.0 - DROP_OUT)
    ok = jnp.all(jnp.isclose(out_train, 0.0, atol=1e-6)
                 | jnp.isclose(out_train, ref * scale, atol=1e-4, rtol=1e-4))
    assert bool(ok)
    pos = ref > 1e-6
    kept_frac = jnp.sum((out_train > 0) & pos) / jnp.maximum(jnp.sum(pos), 1)
    assert 0.3 < float(kept_frac) < 0.7   # keep rate ~= 1 - p

    # Tiny-batch path (B < 64): fused XLA, no Pallas launch overhead.
    x_small = jax.random.normal(kx2, (8, F_IN), dtype=jnp.float32)
    out_small = fc_forward(x_small, w_pad, b_pad, seed0,
                           num_classes=C, drop_p=DROP_OUT, training=False)
    ref_small = jnp.maximum(
        x_small.astype(jnp.bfloat16).astype(jnp.float32) @ wb.T + (b if BIAS else 0.0), 0.0)
    assert out_small.shape == (8, NUM_CLASSES)
    assert jnp.allclose(out_small, ref_small, atol=1e-4, rtol=1e-4)

    jax.block_until_ready((out_eval, out_train, out_small))
    print("KERNEL_OK")
</pallas_src>

<mosaic_0001>
module attributes {stable_mosaic.version = 11 : i64} {
  func.func @_fc_kernel(%arg0: i32, %arg1: memref<1xi32, #tpu.memory_space<smem>>, %arg2: memref<256x20xbf16, #tpu.memory_space<vmem>>, %arg3: memref<20x128xbf16, #tpu.memory_space<vmem>>, %arg4: memref<1x128xf32, #tpu.memory_space<vmem>>, %arg5: memref<256x128xf32, #tpu.memory_space<vmem>>) attributes {dimension_semantics = [#tpu.dimension_semantics<parallel>], iteration_bounds = array<i64: 2>, scalar_prefetch = 0 : i64, scratch_operands = 0 : i64, tpu.core_type = #tpu.core_type<tc>, window_params = [{transform_indices = @transform_0, window_bounds = array<i64: 1>}, {transform_indices = @transform_1, window_bounds = array<i64: 256, 20>}, {pipeline_mode = #tpu.pipeline_mode<synchronous>, transform_indices = @transform_2, window_bounds = array<i64: 20, 128>}, {pipeline_mode = #tpu.pipeline_mode<synchronous>, transform_indices = @transform_3, window_bounds = array<i64: 1, 128>}, {transform_indices = @transform_4, window_bounds = array<i64: 256, 128>}]} {
    %c0 = arith.constant 0 : index
    %c0_0 = arith.constant 0 : index
    %0 = vector.load %arg2[%c0, %c0_0] : memref<256x20xbf16, #tpu.memory_space<vmem>>, vector<256x20xbf16>
    %c0_1 = arith.constant 0 : index
    %c0_2 = arith.constant 0 : index
    %1 = vector.load %arg3[%c0_1, %c0_2] : memref<20x128xbf16, #tpu.memory_space<vmem>>, vector<20x128xbf16>
    %cst = arith.constant dense<0.000000e+00> : vector<256x128xf32>
    %2 = tpu.matmul %0, %1, %cst {dimension_numbers = #tpu.dot_dimension_numbers<[1], [0], [0], [1], [0, 0, 1, 1], [], []>} : vector<256x20xbf16>, vector<20x128xbf16>, vector<256x128xf32> -> vector<256x128xf32>
    %c0_3 = arith.constant 0 : index
    %c0_4 = arith.constant 0 : index
    %3 = vector.load %arg4[%c0_3, %c0_4] : memref<1x128xf32, #tpu.memory_space<vmem>>, vector<1x128xf32>
    %4 = vector.broadcast %3 : vector<1x128xf32> to vector<256x128xf32>
    %5 = arith.addf %2, %4 : vector<256x128xf32>
    %cst_5 = arith.constant 0.000000e+00 : f32
    %6 = vector.broadcast %cst_5 : f32 to vector<256x128xf32>
    %7 = arith.maximumf %5, %6 : vector<256x128xf32>
    %c0_6 = arith.constant 0 : index
    %c0_7 = arith.constant 0 : index
    %8 = vector.load %arg5[%c0_6, %c0_7] : memref<256x128xf32, #tpu.memory_space<vmem>>, vector<256x128xf32>
    tpu.vector_store %arg5[%c0_6, %c0_7], %7 {strides = array<i32>} : memref<256x128xf32, #tpu.memory_space<vmem>>, vector<256x128xf32>,
    return
  }
  func.func @transform_0(%arg0: i32) -> i32 {
    %c0_i32 = arith.constant 0 : i32
    %c0_i32_0 = arith.constant 0 : i32
    return %c0_i32 : i32
  }
  func.func @transform_1(%arg0: i32) -> (i32, i32) {
    %c0_i32 = arith.constant 0 : i32
    %c0_i32_0 = arith.constant 0 : i32
    return %arg0, %c0_i32 : i32, i32
  }
  func.func @transform_2(%arg0: i32) -> (i32, i32) {
    %c0_i32 = arith.constant 0 : i32
    %c0_i32_0 = arith.constant 0 : i32
    %c0_i32_1 = arith.constant 0 : i32
    return %c0_i32, %c0_i32_0 : i32, i32
  }
  func.func @transform_3(%arg0: i32) -> (i32, i32) {
    %c0_i32 = arith.constant 0 : i32
    %c0_i32_0 = arith.constant 0 : i32
    %c0_i32_1 = arith.constant 0 : i32
    return %c0_i32, %c0_i32_0 : i32, i32
  }
  func.func @transform_4(%arg0: i32) -> (i32, i32) {
    %c0_i32 = arith.constant 0 : i32
    %c0_i32_0 = arith.constant 0 : i32
    return %arg0, %c0_i32 : i32, i32
  }
}

</mosaic_0001>

<llo_original>
// kernel: fc_forward.1
$region0: #{fc_forward.1}
  #allocation0 [shape = 'u32[]', space=smem, size = 0x4, offset = 0x4, fixed_abs, tag = 'smem constant byte address 0x4 - core index']
  #allocation1 [shape = 'u32[72,128]{1,0:T(1,128)}', space=vmem, size = 0x9000, scoped, tag = 'internal scratch']
  #allocation2 [shape = 'u32[1]{0:T(128)S(6)}', space=smem, size = 0x200, scoped, tag = 'scoped memory for fc_forward.1']
  %s0 = inlined_call_operand.<no memory space> [shape: u32[1], index: 0, kind: input, shape index: {}]
  %s1 = inlined_call_operand.vmem [shape: bf16[512,20], index: 1, kind: input, shape index: {}]
  %s2 = inlined_call_operand.vmem [shape: bf16[20,128], index: 2, kind: input, shape index: {}]
  %s3 = inlined_call_operand.vmem [shape: f32[1,128], index: 3, kind: input, shape index: {}]
  %s4 = inlined_call_operand.vmem [shape: f32[512,128], index: 4, kind: output, shape index: {}]
  %s5 = sld [smem:[#allocation0]]
  $region49: #{fc_forward.1} parent=0
    _
  %s7 = ssub.s32 1, %s5
  %s8 = scalar_select 0, %s7, %s5
  %9 = sst [smem:[#allocation2]] %s0
  loop: start=0, step=1, limit=4
  $region2: #{fc_forward.1} parent=0 // loop_pre_header
    _
  $region3: #{fc_forward.1} parent=0 // loop_header
    %s11 = sphi 0, %s15
    %p12 = scmp.ge.s32.totalorder %s11, 4
    %s19 = sphi 0, %s19
    %s21 = sphi 0, %s19
    %s22 = sphi 0, %s21
    %s36 = sphi 0, %s22
    %s42 = sphi 0, %s44
    %s45 = sphi 0, %s42
    %s46 = sphi 0, %s45
    %s62 = sphi 0, %s46
    %s66 = sphi 0, %s66
    %s68 = sphi 0, %s66
    %s69 = sphi 0, %s68
    %s83 = sphi 0, %s69
    %s87 = sphi 0, %s87
    %s89 = sphi 0, %s87
    %s90 = sphi 0, %s89
    %s104 = sphi 0, %s90
    %s110 = sphi 0, %s112
    %s113 = sphi 0, %s110
    %s114 = sphi 0, %s113
    %s130 = sphi 0, %s114
  $region4: #{fc_forward.1} parent=0 // loop_header_branch
    %14 = sbr.rel (%p12) target = $region8
  $region5: #{fc_forward.1} parent=0 // loop_body
    %s16 = ssub.s32 %s11, 1
    %s17 = ssub.s32 %s11, 2
    %s18 = sadd.s32 %s11, 1
    %s20 = sadd.s32 %s19, 1
    %p23 = scmp.eq.s32.totalorder %s11, 1
    %p24 = scmp.ne.s32.totalorder %s19, %s21
    %p25 = scmp.eq.s32.totalorder %s11, 0
    %p26 = por %p24, %p25
    %p27 = scmp.ne.s32.totalorder %s19, %s21
    %p28 = scmp.eq.s32.totalorder %s16, 1
    %p29 = por %p27, %p28
    %p30 = scmp.ne.s32.totalorder %s21, %s22
    %p31 = scmp.eq.s32.totalorder %s16, 0
    %p32 = por %p30, %p31
    %p33 = scmp.ne.s32.totalorder %s21, %s22
    %p34 = scmp.eq.s32.totalorder %s17, 1
    %p35 = por %p33, %p34
    %p37 = scmp.ne.s32.totalorder %s22, %s36
    %p38 = scmp.eq.s32.totalorder %s17, 0
    %p39 = por %p37, %p38
    %s40 = ssub.s32 %s11, %s18
    %p41 = scmp.eq.s32.totalorder %s40, 0
    %s43 = sadd.s32 %s42, 1
    %s44 = scalar_select %p41, %s42, %s43
    %p47 = pneg %p41
    %p48 = scmp.eq.s32.totalorder %s11, 1
    %p49 = por %p47, %p48
    %p50 = scmp.ne.s32.totalorder %s42, %s45
    %p51 = scmp.eq.s32.totalorder %s11, 0
    %p52 = por %p50, %p51
    %p53 = scmp.ne.s32.totalorder %s42, %s45
    %p54 = scmp.eq.s32.totalorder %s16, 1
    %p55 = por %p53, %p54
    %p56 = scmp.ne.s32.totalorder %s45, %s46
    %p57 = scmp.eq.s32.totalorder %s16, 0
    %p58 = por %p56, %p57
    %p59 = scmp.ne.s32.totalorder %s45, %s46
    %p60 = scmp.eq.s32.totalorder %s17, 1
    %p61 = por %p59, %p60
    %p63 = scmp.ne.s32.totalorder %s46, %s62
    %p64 = scmp.eq.s32.totalorder %s17, 0
    %p65 = por %p63, %p64
    %s67 = sadd.s32 %s66, 1
    %p70 = scmp.eq.s32.totalorder %s11, 1
    %p71 = scmp.ne.s32.totalorder %s66, %s68
    %p72 = scmp.eq.s32.totalorder %s11, 0
    %p73 = por %p71, %p72
    %p74 = scmp.ne.s32.totalorder %s66, %s68
    %p75 = scmp.eq.s32.totalorder %s16, 1
    %p76 = por %p74, %p75
    %p77 = scmp.ne.s32.totalorder %s68, %s69
    %p78 = scmp.eq.s32.totalorder %s16, 0
    %p79 = por %p77, %p78
    %p80 = scmp.ne.s32.totalorder %s68, %s69
    %p81 = scmp.eq.s32.totalorder %s17, 1
    %p82 = por %p80, %p81
    %p84 = scmp.ne.s32.totalorder %s69, %s83
    %p85 = scmp.eq.s32.totalorder %s17, 0
    %p86 = por %p84, %p85
    %s88 = sadd.s32 %s87, 1
    %p91 = scmp.eq.s32.totalorder %s11, 1
    %p92 = scmp.ne.s32.totalorder %s87, %s89
    %p93 = scmp.eq.s32.totalorder %s11, 0
    %p94 = por %p92, %p93
    %p95 = scmp.ne.s32.totalorder %s87, %s89
    %p96 = scmp.eq.s32.totalorder %s16, 1
    %p97 = por %p95, %p96
    %p98 = scmp.ne.s32.totalorder %s89, %s90
    %p99 = scmp.eq.s32.totalorder %s16, 0
    %p100 = por %p98, %p99
    %p101 = scmp.ne.s32.totalorder %s89, %s90
    %p102 = scmp.eq.s32.totalorder %s17, 1
    %p103 = por %p101, %p102
    %p105 = scmp.ne.s32.totalorder %s90, %s104
    %p106 = scmp.eq.s32.totalorder %s17, 0
    %p107 = por %p105, %p106
    %s108 = ssub.s32 %s11, %s18
    %p109 = scmp.eq.s32.totalorder %s108, 0
    %s111 = sadd.s32 %s110, 1
    %s112 = scalar_select %p109, %s110, %s111
    %p115 = pneg %p109
    %p116 = scmp.eq.s32.totalorder %s11, 1
    %p117 = por %p115, %p116
    %p118 = scmp.ne.s32.totalorder %s110, %s113
    %p119 = scmp.eq.s32.totalorder %s11, 0
    %p120 = por %p118, %p119
    %p121 = scmp.ne.s32.totalorder %s110, %s113
    %p122 = scmp.eq.s32.totalorder %s16, 1
    %p123 = por %p121, %p122
    %p124 = scmp.ne.s32.totalorder %s113, %s114
    %p125 = scmp.eq.s32.totalorder %s16, 0
    %p126 = por %p124, %p125
    %p127 = scmp.ne.s32.totalorder %s113, %s114
    %p128 = scmp.eq.s32.totalorder %s17, 1
    %p129 = por %p127, %p128
    %p131 = scmp.ne.s32.totalorder %s114, %s130
    %p132 = scmp.eq.s32.totalorder %s17, 0
    %p133 = por %p131, %p132
    %p134 = scmp.le.s32.totalorder 1, %s11
    %p135 = scmp.lt.s32.totalorder %s11, 3
    %p136 = pnand %p134, %p135
    %p137 = pneg %p136
    // Predicated region
    $region9: #{fc_forward.1} parent=5 // pred_check
      _
    $region10: #{fc_forward.1} parent=5 // pred_check_branch
      %139 = sbr.rel (%p136) target = $region12
    $region11: #{fc_forward.1} parent=5 // pred_region
      %s140 = ssub.s32 %s11, 1
      // Predicated region
      $region13: #{fc_forward.1} parent=11 // pred_check
        %p141 = pneg %p32
      $region14: #{fc_forward.1} parent=11 // pred_check_branch
        %143 = sbr.rel (%p141) target = $region16
      $region15: #{fc_forward.1} parent=11 // pred_region
        _
      $region16: #{fc_forward.1} parent=11 // pred_fallthru
        _
      // Predicated region
      $region17: #{fc_forward.1} parent=11 // pred_check
        %p144 = pneg %p79
      $region18: #{fc_forward.1} parent=11 // pred_check_branch
        %146 = sbr.rel (%p144) target = $region20
      $region19: #{fc_forward.1} parent=11 // pred_region
        _
      $region20: #{fc_forward.1} parent=11 // pred_fallthru
        _
      // Predicated region
      $region21: #{fc_forward.1} parent=11 // pred_check
        %p147 = pneg %p100
      $region22: #{fc_forward.1} parent=11 // pred_check_branch
        %149 = sbr.rel (%p147) target = $region24
      $region23: #{fc_forward.1} parent=11 // pred_region
        _
      $region24: #{fc_forward.1} parent=11 // pred_fallthru
        _
    $region12: #{fc_forward.1} parent=5 // pred_fallthru
      _
    %p150 = scmp.lt.s32.totalorder %s11, 2
    // Predicated region
    $region25: #{fc_forward.1} parent=5 // pred_check
      %p151 = pneg %p150
    $region26: #{fc_forward.1} parent=5 // pred_check_branch
      %153 = sbr.rel (%p151) target = $region28
    $region27: #{fc_forward.1} parent=5 // pred_region
      // Predicated region
      $region29: #{fc_forward.1} parent=27 // pred_check
        %p154 = pneg %p52
      $region30: #{fc_forward.1} parent=27 // pred_check_branch
        %156 = sbr.rel (%p154) target = $region32
      $region31: #{fc_forward.1} parent=27 // pred_region
        %s157 = smul.u32 32, %s11
        %p158 = scmp.lt.s32.totalorder %s157, 63
        %s159 = scalar_select %p158, %s157, 63
        %s160 = smul.addr %s159, 4
        %s161 = scalar_lea.vmem %s1, %s160
        %s162 = smul.u32 32, %s11
      $region32: #{fc_forward.1} parent=27 // pred_fallthru
        _
    $region28: #{fc_forward.1} parent=5 // pred_fallthru
      _
    %p163 = scmp.le.s32.totalorder 1, %s11
    %p164 = scmp.lt.s32.totalorder %s11, 3
    %p165 = pnand %p163, %p164
    %p166 = pneg %p165
    // Predicated region
    $region33: #{fc_forward.1} parent=5 // pred_check
      _
    $region34: #{fc_forward.1} parent=5 // pred_check_branch
      %168 = sbr.rel (%p165) target = $region36
    $region35: #{fc_forward.1} parent=5 // pred_region
      %s169 = ssub.s32 %s11, 1
      %p170 = pneg %p32
      %p171 = pneg %p29
      %s172 = smul.u32 32, %s16
      %p173 = scmp.lt.s32.totalorder %s172, 63
      %s174 = scalar_select %p173, %s172, 63
      %s175 = smul.addr %s174, 4
      %s176 = scalar_lea.vmem %s1, %s175
      %p177 = pneg %p58
      %p178 = pneg %p55
      %p179 = pneg %p79
      %p180 = pneg %p76
      %p181 = pneg %p100
      %p182 = pneg %p97
      %p183 = pneg %p126
      %p184 = pneg %p123
      %s185 = smul.u32 32, %s16
      %p186 = scmp.lt.s32.totalorder %s185, 63
      %s187 = scalar_select %p186, %s185, 63
      %s188 = smul.addr %s187, 8
      %s189 = scalar_lea.vmem %s4, %s188
      %s190 = smul.u32 32, %s16
      %p191 = scmp.lt.s32.totalorder %s190, 63
      %s192 = scalar_select %p191, %s190, 63
      %s193 = smul.addr %s192, 4
      %s194 = scalar_lea.vmem %s1, %s193
      %s195 = smul.u32 32, %s16
      %s196 = smul.u32 32, %s16
      %p197 = scmp.lt.s32.totalorder %s196, 63
      %s198 = scalar_select %p197, %s196, 63
      %s199 = smul.addr %s198, 8
      %s200 = scalar_lea.vmem %s4, %s199
      %s201 = smul.u32 32, %s16
      %v203 = vld [vmem:[%s194] sm:$0xf]
      %v204 = vld [vmem:[%s194 + $0x4] sm:$0xf]
      %v205 = vld [vmem:[%s194 + $0x8] sm:$0xf]
      %v206 = vld [vmem:[%s194 + $0xc] sm:$0xf]
      %v207 = vld [vmem:[%s194 + $0x10] sm:$0xf]
      %v208 = vld [vmem:[%s194 + $0x14] sm:$0xf]
      %v209 = vld [vmem:[%s194 + $0x18] sm:$0xf]
      %v210 = vld [vmem:[%s194 + $0x1c] sm:$0xf]
      %v211 = vld [vmem:[%s194 + $0x20] sm:$0xf]
      %v212 = vld [vmem:[%s194 + $0x24] sm:$0xf]
      %v213 = vld [vmem:[%s194 + $0x28] sm:$0xf]
      %v214 = vld [vmem:[%s194 + $0x2c] sm:$0xf]
      %v215 = vld [vmem:[%s194 + $0x30] sm:$0xf]
      %v216 = vld [vmem:[%s194 + $0x34] sm:$0xf]
      %v217 = vld [vmem:[%s194 + $0x38] sm:$0xf]
      %v218 = vld [vmem:[%s194 + $0x3c] sm:$0xf]
      %v219 = vld [vmem:[%s194 + $0x40] sm:$0xf]
      %v220 = vld [vmem:[%s194 + $0x44] sm:$0xf]
      %v221 = vld [vmem:[%s194 + $0x48] sm:$0xf]
      %v222 = vld [vmem:[%s194 + $0x4c] sm:$0xf]
      %v223 = vld [vmem:[%s194 + $0x50] sm:$0xf]
      %v224 = vld [vmem:[%s194 + $0x54] sm:$0xf]
      %v225 = vld [vmem:[%s194 + $0x58] sm:$0xf]
      %v226 = vld [vmem:[%s194 + $0x5c] sm:$0xf]
      %v227 = vld [vmem:[%s194 + $0x60] sm:$0xf]
      %v228 = vld [vmem:[%s194 + $0x64] sm:$0xf]
      %v229 = vld [vmem:[%s194 + $0x68] sm:$0xf]
      %v230 = vld [vmem:[%s194 + $0x6c] sm:$0xf]
      %v231 = vld [vmem:[%s194 + $0x70] sm:$0xf]
      %v232 = vld [vmem:[%s194 + $0x74] sm:$0xf]
      %v233 = vld [vmem:[%s194 + $0x78] sm:$0xf]
      %v234 = vld [vmem:[%s194 + $0x7c] sm:$0xf]
      %v235 = vld [vmem:[%s2] sm:$0xf]
      %v236 = vld [vmem:[%s2 + $0x4] sm:$0xf]
      %v237 = vld [vmem:[%s2 + $0x8] sm:$0x3]
      %v238 = vld [vmem:[%s3] sm:$0x1]
      %v240 = vperm.slane %v238, 0
      %v274 = vunpack.c.l.b16 %v203
      %v275 = vunpack.c.l.b16 %v204
      %v276 = vunpack.c.l.b16 %v205
      %v277 = vunpack.c.l.b16 %v206
      %v278 = vunpack.c.l.b16 %v207
      %v279 = vunpack.c.l.b16 %v208
      %v280 = vunpack.c.l.b16 %v209
      %v281 = vunpack.c.l.b16 %v210
      %v282 = vunpack.c.l.b16 %v211
      %v283 = vunpack.c.l.b16 %v212
      %v284 = vunpack.c.l.b16 %v213
      %v285 = vunpack.c.l.b16 %v214
      %v286 = vunpack.c.l.b16 %v215
      %v287 = vunpack.c.l.b16 %v216
      %v288 = vunpack.c.l.b16 %v217
      %v289 = vunpack.c.l.b16 %v218
      %v290 = vunpack.c.l.b16 %v219
      %v291 = vunpack.c.l.b16 %v220
      %v292 = vunpack.c.l.b16 %v221
      %v293 = vunpack.c.l.b16 %v222
      %v294 = vunpack.c.l.b16 %v223
      %v295 = vunpack.c.l.b16 %v224
      %v296 = vunpack.c.l.b16 %v225
      %v297 = vunpack.c.l.b16 %v226
      %v298 = vunpack.c.l.b16 %v227
      %v299 = vunpack.c.l.b16 %v228
      %v300 = vunpack.c.l.b16 %v229
      %v301 = vunpack.c.l.b16 %v230
      %v302 = vunpack.c.l.b16 %v231
      %v303 = vunpack.c.l.b16 %v232
      %v304 = vunpack.c.l.b16 %v233
      %v305 = vunpack.c.l.b16 %v234
      %v306 = vpack.c.b16 %v275, %v274
      %v307 = vpack.c.b16 %v277, %v276
      %v308 = vpack.c.b16 %v279, %v278
      %v309 = vpack.c.b16 %v281, %v280
      %v310 = vpack.c.b16 %v283, %v282
      %v311 = vpack.c.b16 %v285, %v284
      %v312 = vpack.c.b16 %v287, %v286
      %v313 = vpack.c.b16 %v289, %v288
      %v314 = vpack.c.b16 %v291, %v290
      %v315 = vpack.c.b16 %v293, %v292
      %v316 = vpack.c.b16 %v295, %v294
      %v317 = vpack.c.b16 %v297, %v296
      %v318 = vpack.c.b16 %v299, %v298
      %v319 = vpack.c.b16 %v301, %v300
      %v320 = vpack.c.b16 %v303, %v302
      %v321 = vpack.c.b16 %v305, %v304
      %v325 = vunpack.c.l.b16 %v235
      %v326 = vunpack.c.l.b16 %v236
      %v327 = vunpack.c.l.b16 %v237
      %v328 = vpack.c.b16 %v326, %v325
      %v329 = vpack.c.b16 %v327, %v327
      %vm331 = vcmask 162816
      %v333 = vsel %vm331, %v306, 0
      %v336 = vsel %vm331, %v307, 0
      %v339 = vsel %vm331, %v308, 0
      %v342 = vsel %vm331, %v309, 0
      %v345 = vsel %vm331, %v310, 0
      %v348 = vsel %vm331, %v311, 0
      %v351 = vsel %vm331, %v312, 0
      %v354 = vsel %vm331, %v313, 0
      %v357 = vsel %vm331, %v314, 0
      %v360 = vsel %vm331, %v315, 0
      %v363 = vsel %vm331, %v316, 0
      %v366 = vsel %vm331, %v317, 0
      %v369 = vsel %vm331, %v318, 0
      %v372 = vsel %vm331, %v319, 0
      %v375 = vsel %vm331, %v320, 0
      %v378 = vsel %vm331, %v321, 0
      %vm380 = vcmask 1041408
      %v382 = vsel %vm380, %v329, 0
      %384 = vmatpush.bf16.msra.mxu0 0
      %385 = vmatpush.bf16.msra.mxu0 0
      %386 = vmatpush.bf16.msra.mxu0 0
      %387 = vmatpush.bf16.msra.mxu0 0
      %388 = vmatpush.bf16.msra.mxu0 0
      %389 = vmatpush.bf16.msra.mxu0 0
      %390 = vmatpush.bf16.msra.mxu0 %v382
      %391 = vmatpush.bf16.msra.mxu0 %v328
      %392 = vmatmul.bf16.gmra.mxu0 %v333
      %v393 = vpop.f32.mrf.mxu0
      %v394 = vadd.f32 %v240, %v393
      %v395 = vpop.f32.mrf.mxu0
      %v396 = vadd.f32 %v240, %v395
      %397 = vmatmul.bf16.gmra.mxu0 %v336
      %v398 = vpop.f32.mrf.mxu0
      %v399 = vadd.f32 %v240, %v398
      %v400 = vpop.f32.mrf.mxu0
      %v401 = vadd.f32 %v240, %v400
      %402 = vmatmul.bf16.gmra.mxu0 %v339
      %v403 = vpop.f32.mrf.mxu0
      %v404 = vadd.f32 %v240, %v403
      %v405 = vpop.f32.mrf.mxu0
      %v406 = vadd.f32 %v240, %v405
      %407 = vmatmul.bf16.gmra.mxu0 %v342
      %v408 = vpop.f32.mrf.mxu0
      %v409 = vadd.f32 %v240, %v408
      %v410 = vpop.f32.mrf.mxu0
      %v411 = vadd.f32 %v240, %v410
      %412 = vmatmul.bf16.gmra.mxu0 %v345
      %v413 = vpop.f32.mrf.mxu0
      %v414 = vadd.f32 %v240, %v413
      %v415 = vpop.f32.mrf.mxu0
      %v416 = vadd.f32 %v240, %v415
      %417 = vmatmul.bf16.gmra.mxu0 %v348
      %v418 = vpop.f32.mrf.mxu0
      %v419 = vadd.f32 %v240, %v418
      %v420 = vpop.f32.mrf.mxu0
      %v421 = vadd.f32 %v240, %v420
      %422 = vmatmul.bf16.gmra.mxu0 %v351
      %v423 = vpop.f32.mrf.mxu0
      %v424 = vadd.f32 %v240, %v423
      %v425 = vpop.f32.mrf.mxu0
      %v426 = vadd.f32 %v240, %v425
      %427 = vmatmul.bf16.gmra.mxu0 %v354
      %v428 = vpop.f32.mrf.mxu0
      %v429 = vadd.f32 %v240, %v428
      %v430 = vpop.f32.mrf.mxu0
      %v431 = vadd.f32 %v240, %v430
      %432 = vmatmul.bf16.gmra.mxu0 %v357
      %v433 = vpop.f32.mrf.mxu0
      %v434 = vadd.f32 %v240, %v433
      %v435 = vpop.f32.mrf.mxu0
      %v436 = vadd.f32 %v240, %v435
      %437 = vmatmul.bf16.gmra.mxu0 %v360
      %v438 = vpop.f32.mrf.mxu0
      %v439 = vadd.f32 %v240, %v438
      %v440 = vpop.f32.mrf.mxu0
      %v441 = vadd.f32 %v240, %v440
      %442 = vmatmul.bf16.gmra.mxu0 %v363
      %v443 = vpop.f32.mrf.mxu0
      %v444 = vadd.f32 %v240, %v443
      %v445 = vpop.f32.mrf.mxu0
      %v446 = vadd.f32 %v240, %v445
      %447 = vmatmul.bf16.gmra.mxu0 %v366
      %v448 = vpop.f32.mrf.mxu0
      %v449 = vadd.f32 %v240, %v448
      %v450 = vpop.f32.mrf.mxu0
      %v451 = vadd.f32 %v240, %v450
      %452 = vmatmul.bf16.gmra.mxu0 %v369
      %v453 = vpop.f32.mrf.mxu0
      %v454 = vadd.f32 %v240, %v453
      %v455 = vpop.f32.mrf.mxu0
      %v456 = vadd.f32 %v240, %v455
      %457 = vmatmul.bf16.gmra.mxu0 %v372
      %v458 = vpop.f32.mrf.mxu0
      %v459 = vadd.f32 %v240, %v458
      %v460 = vpop.f32.mrf.mxu0
      %v461 = vadd.f32 %v240, %v460
      %462 = vmatmul.bf16.gmra.mxu0 %v375
      %v463 = vpop.f32.mrf.mxu0
      %v464 = vadd.f32 %v240, %v463
      %v465 = vpop.f32.mrf.mxu0
      %v466 = vadd.f32 %v240, %v465
      %467 = vmatmul.bf16.gmra.mxu0 %v378
      %v468 = vpop.f32.mrf.mxu0
      %v469 = vadd.f32 %v240, %v468
      %v470 = vpop.f32.mrf.mxu0
      %v471 = vadd.f32 %v240, %v470
      %472 = vdwg.mxu0
      %v473 = vmax.f32 %v394, 0.0
      %v474 = vmax.f32 %v396, 0.0
      %v475 = vmax.f32 %v399, 0.0
      %v476 = vmax.f32 %v401, 0.0
      %v477 = vmax.f32 %v404, 0.0
      %v478 = vmax.f32 %v406, 0.0
      %v479 = vmax.f32 %v409, 0.0
      %v480 = vmax.f32 %v411, 0.0
      %v481 = vmax.f32 %v414, 0.0
      %v482 = vmax.f32 %v416, 0.0
      %v483 = vmax.f32 %v419, 0.0
      %v484 = vmax.f32 %v421, 0.0
      %v485 = vmax.f32 %v424, 0.0
      %v486 = vmax.f32 %v426, 0.0
      %v487 = vmax.f32 %v429, 0.0
      %v488 = vmax.f32 %v431, 0.0
      %v489 = vmax.f32 %v434, 0.0
      %v490 = vmax.f32 %v436, 0.0
      %v491 = vmax.f32 %v439, 0.0
      %v492 = vmax.f32 %v441, 0.0
      %v493 = vmax.f32 %v444, 0.0
      %v494 = vmax.f32 %v446, 0.0
      %v495 = vmax.f32 %v449, 0.0
      %v496 = vmax.f32 %v451, 0.0
      %v497 = vmax.f32 %v454, 0.0
      %v498 = vmax.f32 %v456, 0.0
      %v499 = vmax.f32 %v459, 0.0
      %v500 = vmax.f32 %v461, 0.0
      %v501 = vmax.f32 %v464, 0.0
      %v502 = vmax.f32 %v466, 0.0
      %v503 = vmax.f32 %v469, 0.0
      %v504 = vmax.f32 %v471, 0.0
      %505 = vst [vmem:[%s200] sm:$0xff] %v473
      %506 = vst [vmem:[%s200 + $0x8] sm:$0xff] %v474
      %507 = vst [vmem:[%s200 + $0x10] sm:$0xff] %v475
      %508 = vst [vmem:[%s200 + $0x18] sm:$0xff] %v476
      %509 = vst [vmem:[%s200 + $0x20] sm:$0xff] %v477
      %510 = vst [vmem:[%s200 + $0x28] sm:$0xff] %v478
      %511 = vst [vmem:[%s200 + $0x30] sm:$0xff] %v479
      %512 = vst [vmem:[%s200 + $0x38] sm:$0xff] %v480
      %513 = vst [vmem:[%s200 + $0x40] sm:$0xff] %v481
      %514 = vst [vmem:[%s200 + $0x48] sm:$0xff] %v482
      %515 = vst [vmem:[%s200 + $0x50] sm:$0xff] %v483
      %516 = vst [vmem:[%s200 + $0x58] sm:$0xff] %v484
      %517 = vst [vmem:[%s200 + $0x60] sm:$0xff] %v485
      %518 = vst [vmem:[%s200 + $0x68] sm:$0xff] %v486
      %519 = vst [vmem:[%s200 + $0x70] sm:$0xff] %v487
      %520 = vst [vmem:[%s200 + $0x78] sm:$0xff] %v488
      %521 = vst [vmem:[%s200 + $0x80] sm:$0xff] %v489
      %522 = vst [vmem:[%s200 + $0x88] sm:$0xff] %v490
      %523 = vst [vmem:[%s200 + $0x90] sm:$0xff] %v491
      %524 = vst [vmem:[%s200 + $0x98] sm:$0xff] %v492
      %525 = vst [vmem:[%s200 + $0xa0] sm:$0xff] %v493
      %526 = vst [vmem:[%s200 + $0xa8] sm:$0xff] %v494
      %527 = vst [vmem:[%s200 + $0xb0] sm:$0xff] %v495
      %528 = vst [vmem:[%s200 + $0xb8] sm:$0xff] %v496
      %529 = vst [vmem:[%s200 + $0xc0] sm:$0xff] %v497
      %530 = vst [vmem:[%s200 + $0xc8] sm:$0xff] %v498
      %531 = vst [vmem:[%s200 + $0xd0] sm:$0xff] %v499
      %532 = vst [vmem:[%s200 + $0xd8] sm:$0xff] %v500
      %533 = vst [vmem:[%s200 + $0xe0] sm:$0xff] %v501
      %534 = vst [vmem:[%s200 + $0xe8] sm:$0xff] %v502
      %535 = vst [vmem:[%s200 + $0xf0] sm:$0xff] %v503
      %536 = vst [vmem:[%s200 + $0xf8] sm:$0xff] %v504
      %s537 = smul.u32 32, %s16
      %p538 = scmp.lt.s32.totalorder %s537, 63
      %s539 = scalar_select %p538, %s537, 63
      %s540 = smul.addr %s539, 8
      %s541 = scalar_lea.vmem %s4, %s540
      // Predicated region
      $region37: #{fc_forward.1} parent=35 // pred_check
        %p542 = pneg %p123
      $region38: #{fc_forward.1} parent=35 // pred_check_branch
        %544 = sbr.rel (%p542) target = $region40
      $region39: #{fc_forward.1} parent=35 // pred_region
        %s545 = smul.u32 32, %s16
      $region40: #{fc_forward.1} parent=35 // pred_fallthru
        _
    $region36: #{fc_forward.1} parent=5 // pred_fallthru
      _
    %p546 = scmp.le.s32.totalorder 2, %s11
    // Predicated region
    $region41: #{fc_forward.1} parent=5 // pred_check
      %p547 = pneg %p546
    $region42: #{fc_forward.1} parent=5 // pred_check_branch
      %549 = sbr.rel (%p547) target = $region44
    $region43: #{fc_forward.1} parent=5 // pred_region
      %s550 = ssub.s32 %s11, 2
      // Predicated region
      $region45: #{fc_forward.1} parent=43 // pred_check
        %p551 = pneg %p129
      $region46: #{fc_forward.1} parent=43 // pred_check_branch
        %553 = sbr.rel (%p551) target = $region48
      $region47: #{fc_forward.1} parent=43 // pred_region
        %s554 = smul.u32 32, %s17
        %p555 = scmp.lt.s32.totalorder %s554, 63
        %s556 = scalar_select %p555, %s554, 63
        %s557 = smul.addr %s556, 8
        %s558 = scalar_lea.vmem %s4, %s557
      $region48: #{fc_forward.1} parent=43 // pred_fallthru
        _
    $region44: #{fc_forward.1} parent=5 // pred_fallthru
      _
  $region6: #{fc_forward.1} parent=0 // loop_footer
    %s15 = sadd.s32 1, %s11
  $region7: #{fc_forward.1} parent=0 // loop_footer_branch
    %10 = sbr.rel target = $region3
  $region8: #{fc_forward.1} parent=0 // loop_exit
    _

</llo_original>
